<compile_context>
chip_gen: v7x
topology: tpu7x:2x2x1
jax: 0.10.0
libtpu: 0.0.40
codegen_flags: <defaults>
</compile_context>

<pallas_src>
import functools

import jax
import jax.numpy as jnp
from jax.experimental import pallas as pl
from jax.experimental.pallas import tpu as pltpu


_LANES = 128
_ACC_ROWS = 8                       # one aligned (8,128) accumulator tile / partition
_N_SIDE = 8                         # packed per-token lanes: 3 targets, 3 mask bits, 2 pad
_VMEM_BUDGET = 40 * 1024 * 1024     # tile sizing budget (fits v7x's 64 MiB VMEM)
_VMEM_LIMIT = 48 * 1024 * 1024      # explicit scoped-VMEM limit (v5e default is 16 MiB)


# ---------------------------------------------------------------------------
# Pallas kernel
# ---------------------------------------------------------------------------
def _masked_ce_tile(y, t, m, label_smoothing):
    """Masked cross-entropy over one (tile, C) block.

    y: (T, C) logits (any float dtype, upcast here), t: (T, 1) i32 clamped targets,
    m: (T, 1) bool mask.  Returns (sum of selected NLL, count of selected rows).
    """
    y = y.astype(jnp.float32)
    mx = jnp.max(y, axis=-1, keepdims=True)
    lse = jnp.log(jnp.sum(jnp.exp(y - mx), axis=-1, keepdims=True)) + mx
    cols = jax.lax.broadcasted_iota(jnp.int32, y.shape, 1)
    tgt_logit = jnp.sum(jnp.where(cols == t, y, 0.0), axis=-1, keepdims=True)
    nll = lse - tgt_logit
    if label_smoothing > 0.0:
        smooth = lse - jnp.mean(y, axis=-1, keepdims=True)
        nll = (1.0 - label_smoothing) * nll + label_smoothing * smooth
    # Use where (NOT multiply): out-of-range rows of ragged/phantom blocks hold
    # garbage logits; Inf/NaN * 0 would poison the accumulator.
    nll = jnp.where(m, nll, 0.0)
    cnt = jnp.where(m, 1.0, 0.0)
    return jnp.sum(nll), jnp.sum(cnt)


def _ce3_kernel(ytag_ref, yinfl_ref, yvoc_ref, side_ref, out_ref,
                *, label_smoothing, n_rows, tile):
    # out_ref: (1, 8, 128) f32 accumulator block, resident across the inner axis.
    # lanes 0..5 of row 0: sum_tag, cnt_tag, sum_infl, cnt_infl, sum_voc, cnt_voc
    it = pl.program_id(1)

    @pl.when(it == 0)
    def _init():
        out_ref[...] = jnp.zeros_like(out_ref)

    # Global (unclamped) tile index: masks both the ragged last real block and
    # the phantom blocks of the last partition (whose index_map is clamped).
    tile_idx = pl.program_id(0) * pl.num_programs(1) + it
    rows = tile_idx * tile + jax.lax.broadcasted_iota(jnp.int32, (tile, 1), 0)
    row_ok = rows < n_rows

    side = side_ref[...]                       # (tile, 8) int32 — one lane-dense DMA
    t_tag, t_infl, t_voc = side[:, 0:1], side[:, 1:2], side[:, 2:3]
    m_tag = (side[:, 3:4] != 0) & row_ok
    m_infl = (side[:, 4:5] != 0) & row_ok
    m_voc = (side[:, 5:6] != 0) & row_ok

    s0, c0 = _masked_ce_tile(ytag_ref[...], t_tag, m_tag, label_smoothing)
    s1, c1 = _masked_ce_tile(yinfl_ref[...], t_infl, m_infl, label_smoothing)
    s2, c2 = _masked_ce_tile(yvoc_ref[...], t_voc, m_voc, label_smoothing)

    # Single-vreg scatter of the six scalars; once per tile-sized step -> negligible.
    lane = jax.lax.broadcasted_iota(jnp.int32, out_ref.shape, 2)
    contrib = jnp.zeros(out_ref.shape, jnp.float32)
    for k, v in enumerate((s0, c0, s1, c1, s2, c2)):
        contrib = jnp.where(lane == k, v, contrib)
    out_ref[...] += contrib


# ---------------------------------------------------------------------------
# Tile sizing against the VMEM budget (generation-safe: sized for v7x's 64 MiB)
# ---------------------------------------------------------------------------
def _pick_tile(n_rows, requested, head_dims, head_dtypes):
    if n_rows <= requested:
        return n_rows                            # single full-extent block

    def est(t):
        b = 2 * t * _N_SIDE * 4                  # packed side ints, double-buffered
        for c, dt in zip(head_dims, head_dtypes):
            b += 2 * t * c * jnp.dtype(dt).itemsize   # double-buffered logits block
            b += 3 * t * c * 4                        # f32 upcast + elementwise temps
        return b

    t = max(16, (requested // 16) * 16)          # multiple of 16 (bf16 sublane pack)
    while t > 16 and est(t) > _VMEM_BUDGET:
        t = max(16, ((t // 2) // 16) * 16)
    return t


# ---------------------------------------------------------------------------
# Wrapper (CEThreeLoss.forward equivalent)
# ---------------------------------------------------------------------------
def ce_three_loss(tag_out, infl_out, voc_out, attention_mask, tgt, batch_mask,
                  tag_lut, word_lut, infl_lut, *, rng,
                  label_smoothing=0.0, beta=1.0, gamma=1.0,
                  mask_keep_prob=0.0, tile=512, n_parts=2):
    B, S, C_tag = tag_out.shape
    C_infl = infl_out.shape[-1]
    C_voc = voc_out.shape[-1]
    N = B * S

    # ---- glue: token validity, tagger lookups, per-loss masks (plain JAX) ----
    # TODO(synk): the torch module's boolean-mask gathers produce dynamic shapes;
    # they are implemented as masked reductions (identical result for mean-CE).
    valid = (batch_mask[:, None] & attention_mask.astype(bool)).reshape(-1)
    t = tgt.reshape(-1).astype(jnp.int32)
    t_tag = jnp.take(tag_lut, t)
    t_word = jnp.take(word_lut, t)
    t_infl = jnp.take(infl_lut, t)

    rand = jax.random.uniform(rng, t.shape)       # torch.rand equivalent
    keep = (t_tag != 0) | (rand > mask_keep_prob)

    m_tag = valid & keep
    m_infl = valid & (t_infl != -1)
    m_voc = valid & (t_word != -1)

    # One lane-dense (N, 8) int32 side channel: clamped targets + mask bits.
    side = jnp.stack([
        jnp.clip(t_tag, 0, C_tag - 1),
        jnp.clip(t_infl, 0, C_infl - 1),
        jnp.clip(t_word, 0, C_voc - 1),
        m_tag.astype(jnp.int32),
        m_infl.astype(jnp.int32),
        m_voc.astype(jnp.int32),
        jnp.zeros_like(t), jnp.zeros_like(t)], axis=-1).astype(jnp.int32)

    # Logits go in at native dtype; no wrapper-side cast/pad pass.
    ytag = tag_out.reshape(N, C_tag)
    yinfl = infl_out.reshape(N, C_infl)
    yvoc = voc_out.reshape(N, C_voc)

    head_dims = (C_tag, C_infl, C_voc)
    head_dtypes = (ytag.dtype, yinfl.dtype, yvoc.dtype)
    tile = _pick_tile(N, int(tile), head_dims, head_dtypes)

    n_tiles = -(-N // tile)
    n_parts = max(1, min(int(n_parts), n_tiles))
    tiles_per_part = -(-n_tiles // n_parts)

    def row_map(c, i):
        # Clamp phantom tiles of the last partition onto a real block; the kernel
        # masks their rows out via the global row index.
        return (jnp.minimum(c * tiles_per_part + i, n_tiles - 1), 0)

    out = pl.pallas_call(
        functools.partial(_ce3_kernel, label_smoothing=float(label_smoothing),
                          n_rows=N, tile=tile),
        out_shape=jax.ShapeDtypeStruct((n_parts, _ACC_ROWS, _LANES), jnp.float32),
        grid_spec=pltpu.PrefetchScalarGridSpec(
            num_scalar_prefetch=0,
            grid=(n_parts, tiles_per_part),
            in_specs=[
                pl.BlockSpec((tile, C_tag), row_map),
                pl.BlockSpec((tile, C_infl), row_map),
                pl.BlockSpec((tile, C_voc), row_map),
                pl.BlockSpec((tile, _N_SIDE), row_map),
            ],
            out_specs=pl.BlockSpec((1, _ACC_ROWS, _LANES), lambda c, i: (c, 0, 0)),
        ),
        compiler_params=pltpu.CompilerParams(
            dimension_semantics=("parallel", "arbitrary"),
            vmem_limit_bytes=_VMEM_LIMIT),
    )(ytag, yinfl, yvoc, side)

    acc = jnp.sum(out[:, 0, :], axis=0)           # combine the per-partition rows
    s_tag, c_tag = acc[0], acc[1]
    s_inf, c_inf = acc[2], acc[3]
    s_voc, c_voc = acc[4], acc[5]

    loss_tag = s_tag / c_tag                      # NaN if no valid tag tokens (torch-like)
    loss_infl = jnp.where(c_inf > 0, s_inf / jnp.maximum(c_inf, 1.0), 0.0)
    loss_voc = jnp.where(c_voc > 0, s_voc / jnp.maximum(c_voc, 1.0), 0.0)
    return loss_tag + gamma * loss_infl + beta * loss_voc


# ---------------------------------------------------------------------------
# Pure-JAX reference (same masked-mean formulation) for a sanity check
# ---------------------------------------------------------------------------
def _reference(tag_out, infl_out, voc_out, attention_mask, tgt, batch_mask,
               tag_lut, word_lut, infl_lut, rng, beta, gamma, mask_keep_prob):
    B, S, _ = tag_out.shape
    N = B * S
    valid = (batch_mask[:, None] & attention_mask.astype(bool)).reshape(-1)
    t = tgt.reshape(-1).astype(jnp.int32)
    t_tag, t_word, t_infl = jnp.take(tag_lut, t), jnp.take(word_lut, t), jnp.take(infl_lut, t)
    rand = jax.random.uniform(rng, t.shape)
    keep = (t_tag != 0) | (rand > mask_keep_prob)

    def mce(y, tc, m):
        lp = jax.nn.log_softmax(y.reshape(N, y.shape[-1]).astype(jnp.float32), axis=-1)
        nll = -jnp.take_along_axis(lp, tc[:, None], axis=-1)[:, 0]
        mf = m.astype(jnp.float32)
        return jnp.sum(nll * mf), jnp.sum(mf)

    s1, c1 = mce(tag_out, jnp.clip(t_tag, 0, None), valid & keep)
    s2, c2 = mce(infl_out, jnp.clip(t_infl, 0, None), valid & (t_infl != -1))
    s3, c3 = mce(voc_out, jnp.clip(t_word, 0, None), valid & (t_word != -1))
    l1 = s1 / c1
    l2 = jnp.where(c2 > 0, s2 / jnp.maximum(c2, 1.0), 0.0)
    l3 = jnp.where(c3 > 0, s3 / jnp.maximum(c3, 1.0), 0.0)
    return l1 + gamma * l2 + beta * l3


# ---------------------------------------------------------------------------
if __name__ == "__main__":
    key = jax.random.PRNGKey(0)
    B, S = 2, 21                        # N = 42 tokens (not a tile multiple)
    C_tag, C_infl, C_voc = 16, 8, 32
    V_tgt = 64
    beta, gamma, label_smoothing, mask_keep_prob = 1.0, 1.0, 0.0, 0.0

    k1, k2, k3, k4, k5 = jax.random.split(key, 5)
    # heads in their native bf16 dtype -- the kernel upcasts per tile
    tag_out = jax.random.normal(k1, (B, S, C_tag), jnp.float32).astype(jnp.bfloat16)
    infl_out = jax.random.normal(k2, (B, S, C_infl), jnp.float32).astype(jnp.bfloat16)
    voc_out = jax.random.normal(k3, (B, S, C_voc), jnp.float32).astype(jnp.bfloat16)
    tgt = jax.random.randint(k4, (B, S), 0, V_tgt, jnp.int32)

    # deterministic synthetic tagger lookup tables (id -> tag/word/infl ids)
    ids = jnp.arange(V_tgt, dtype=jnp.int32)
    tag_lut = ids % C_tag                                  # zeros -> exercises keep_mask
    word_lut = jnp.where(ids % 3 == 0, -1, ids % C_voc)    # -1 => no vocab target
    infl_lut = jnp.where(ids % 4 == 0, -1, ids % C_infl)   # -1 => no inflection target

    # attention mask: first sequence fully valid, second sequence half valid
    attention_mask = jnp.concatenate(
        [jnp.ones((1, S), jnp.int32),
         jnp.concatenate([jnp.ones((1, S // 2), jnp.int32),
                          jnp.zeros((1, S - S // 2), jnp.int32)], axis=1)], axis=0)
    batch_mask = jnp.array([True, True])

    ref = _reference(tag_out, infl_out, voc_out, attention_mask, tgt,
                     batch_mask, tag_lut, word_lut, infl_lut, k5,
                     beta, gamma, mask_keep_prob)

    # multi-tile path: ragged last block + phantom (clamped) block on partition 1
    loss_small_tile = ce_three_loss(
        tag_out, infl_out, voc_out, attention_mask, tgt, batch_mask,
        tag_lut, word_lut, infl_lut, rng=k5,
        label_smoothing=label_smoothing, beta=beta, gamma=gamma,
        mask_keep_prob=mask_keep_prob, tile=16, n_parts=2)

    # default (large-tile) path: single full-extent block
    loss_default = ce_three_loss(
        tag_out, infl_out, voc_out, attention_mask, tgt, batch_mask,
        tag_lut, word_lut, infl_lut, rng=k5,
        label_smoothing=label_smoothing, beta=beta, gamma=gamma,
        mask_keep_prob=mask_keep_prob)

    loss_small_tile, loss_default = jax.block_until_ready((loss_small_tile, loss_default))

    assert jnp.allclose(loss_small_tile, ref, atol=1e-2, rtol=1e-2), (loss_small_tile, ref)
    assert jnp.allclose(loss_default, ref, atol=1e-2, rtol=1e-2), (loss_default, ref)

    print("KERNEL_OK")
</pallas_src>

<mosaic_0001>
module attributes {stable_mosaic.version = 11 : i64} {
  func.func @_ce3_kernel(%arg0: i32, %arg1: i32, %arg2: memref<16x16xbf16, #tpu.memory_space<vmem>>, %arg3: memref<16x8xbf16, #tpu.memory_space<vmem>>, %arg4: memref<16x32xbf16, #tpu.memory_space<vmem>>, %arg5: memref<16x8xi32, #tpu.memory_space<vmem>>, %arg6: memref<1x8x128xf32, #tpu.memory_space<vmem>>) attributes {dimension_semantics = [#tpu.dimension_semantics<parallel>, #tpu.dimension_semantics<arbitrary>], iteration_bounds = array<i64: 2, 2>, scalar_prefetch = 0 : i64, scratch_operands = 0 : i64, tpu.core_type = #tpu.core_type<tc>, window_params = [{transform_indices = @transform_0, window_bounds = array<i64: 16, 16>}, {transform_indices = @transform_1, window_bounds = array<i64: 16, 8>}, {transform_indices = @transform_2, window_bounds = array<i64: 16, 32>}, {transform_indices = @transform_3, window_bounds = array<i64: 16, 8>}, {transform_indices = @transform_4, window_bounds = array<i64: 1, 8, 128>}]} {
    %c0_i32 = arith.constant 0 : i32
    %0 = arith.cmpi eq, %arg1, %c0_i32 : i32
    %1 = arith.extui %0 : i1 to i32
    %c0_i32_0 = arith.constant 0 : i32
    %2 = arith.cmpi ne, %1, %c0_i32_0 : i32
    scf.if %2 {
      %cst_46 = arith.constant 0.000000e+00 : f32
      %152 = vector.broadcast %cst_46 : f32 to vector<1x8x128xf32>
      %c0_47 = arith.constant 0 : index
      %c0_48 = arith.constant 0 : index
      %c0_49 = arith.constant 0 : index
      %153 = vector.load %arg6[%c0_47, %c0_48, %c0_49] : memref<1x8x128xf32, #tpu.memory_space<vmem>>, vector<1x8x128xf32>
      tpu.vector_store %arg6[%c0_47, %c0_48, %c0_49], %152 {strides = array<i32>} : memref<1x8x128xf32, #tpu.memory_space<vmem>>, vector<1x8x128xf32>,
    } else {
    }
    %c2_i32 = arith.constant 2 : i32
    %3 = arith.muli %arg0, %c2_i32 : i32
    %4 = arith.addi %3, %arg1 : i32
    %c16_i32 = arith.constant 16 : i32
    %5 = arith.muli %4, %c16_i32 : i32
    %6 = tpu.iota {dimensions = array<i32: 0>} : vector<16x1xi32>
    %7 = vector.broadcast %5 : i32 to vector<16x1xi32>
    %8 = arith.addi %7, %6 : vector<16x1xi32>
    %c42_i32 = arith.constant 42 : i32
    %9 = vector.broadcast %c42_i32 : i32 to vector<16x1xi32>
    %10 = arith.cmpi slt, %8, %9 : vector<16x1xi32>
    %c0 = arith.constant 0 : index
    %c0_1 = arith.constant 0 : index
    %11 = vector.load %arg5[%c0, %c0_1] : memref<16x8xi32, #tpu.memory_space<vmem>>, vector<16x8xi32>
    %12 = vector.extract_strided_slice %11 {offsets = [0, 0], sizes = [16, 1], strides = [1, 1]} : vector<16x8xi32> to vector<16x1xi32>
    %13 = vector.extract_strided_slice %11 {offsets = [0, 1], sizes = [16, 1], strides = [1, 1]} : vector<16x8xi32> to vector<16x1xi32>
    %14 = vector.extract_strided_slice %11 {offsets = [0, 2], sizes = [16, 1], strides = [1, 1]} : vector<16x8xi32> to vector<16x1xi32>
    %15 = vector.extract_strided_slice %11 {offsets = [0, 3], sizes = [16, 1], strides = [1, 1]} : vector<16x8xi32> to vector<16x1xi32>
    %c0_i32_2 = arith.constant 0 : i32
    %16 = vector.broadcast %c0_i32_2 : i32 to vector<16x1xi32>
    %17 = arith.cmpi ne, %15, %16 : vector<16x1xi32>
    %18 = arith.andi %17, %10 : vector<16x1xi1>
    %19 = vector.extract_strided_slice %11 {offsets = [0, 4], sizes = [16, 1], strides = [1, 1]} : vector<16x8xi32> to vector<16x1xi32>
    %c0_i32_3 = arith.constant 0 : i32
    %20 = vector.broadcast %c0_i32_3 : i32 to vector<16x1xi32>
    %21 = arith.cmpi ne, %19, %20 : vector<16x1xi32>
    %22 = arith.andi %21, %10 : vector<16x1xi1>
    %23 = vector.extract_strided_slice %11 {offsets = [0, 5], sizes = [16, 1], strides = [1, 1]} : vector<16x8xi32> to vector<16x1xi32>
    %c0_i32_4 = arith.constant 0 : i32
    %24 = vector.broadcast %c0_i32_4 : i32 to vector<16x1xi32>
    %25 = arith.cmpi ne, %23, %24 : vector<16x1xi32>
    %26 = arith.andi %25, %10 : vector<16x1xi1>
    %c0_5 = arith.constant 0 : index
    %c0_6 = arith.constant 0 : index
    %27 = vector.load %arg2[%c0_5, %c0_6] : memref<16x16xbf16, #tpu.memory_space<vmem>>, vector<16x16xbf16>
    %28 = arith.extf %27 : vector<16x16xbf16> to vector<16x16xf32>
    %cst = arith.constant dense<0xFF800000> : vector<16xf32>
    %29 = vector.multi_reduction <maximumf>, %28, %cst [1] : vector<16x16xf32> to vector<16xf32>
    %30 = vector.shape_cast %29 : vector<16xf32> to vector<16x1xf32>
    %31 = vector.broadcast %30 : vector<16x1xf32> to vector<16x16xf32>
    %32 = arith.subf %28, %31 : vector<16x16xf32>
    %33 = math.exp %32 : vector<16x16xf32>
    %cst_7 = arith.constant dense<0.000000e+00> : vector<16xf32>
    %34 = vector.multi_reduction <add>, %33, %cst_7 [1] : vector<16x16xf32> to vector<16xf32>
    %35 = vector.shape_cast %34 : vector<16xf32> to vector<16x1xf32>
    %36 = math.log %35 : vector<16x1xf32>
    %37 = arith.addf %36, %30 : vector<16x1xf32>
    %38 = tpu.iota {dimensions = array<i32: 1>} : vector<16x16xi32>
    %39 = vector.broadcast %12 : vector<16x1xi32> to vector<16x16xi32>
    %40 = arith.cmpi eq, %38, %39 : vector<16x16xi32>
    %cst_8 = arith.constant 0.000000e+00 : f32
    %41 = vector.broadcast %cst_8 : f32 to vector<16x16xf32>
    %42 = arith.select %40, %28, %41 : vector<16x16xi1>, vector<16x16xf32>
    %cst_9 = arith.constant dense<0.000000e+00> : vector<16xf32>
    %43 = vector.multi_reduction <add>, %42, %cst_9 [1] : vector<16x16xf32> to vector<16xf32>
    %44 = vector.shape_cast %43 : vector<16xf32> to vector<16x1xf32>
    %45 = arith.subf %37, %44 : vector<16x1xf32>
    %cst_10 = arith.constant 0.000000e+00 : f32
    %46 = vector.broadcast %cst_10 : f32 to vector<16x1xf32>
    %47 = arith.select %18, %45, %46 : vector<16x1xi1>, vector<16x1xf32>
    %cst_11 = arith.constant 1.000000e+00 : f32
    %cst_12 = arith.constant 0.000000e+00 : f32
    %48 = vector.broadcast %cst_11 : f32 to vector<16x1xf32>
    %49 = vector.broadcast %cst_12 : f32 to vector<16x1xf32>
    %50 = arith.select %18, %48, %49 : vector<16x1xi1>, vector<16x1xf32>
    %51 = vector.shape_cast %47 : vector<16x1xf32> to vector<1x16x1xf32>
    %cst_13 = arith.constant dense<0.000000e+00> : vector<1xf32>
    %52 = vector.multi_reduction <add>, %51, %cst_13 [1, 2] : vector<1x16x1xf32> to vector<1xf32>
    %53 = vector.shape_cast %52 : vector<1xf32> to vector<1x1x1xf32>
    %54 = vector.extract %53[0, 0, 0] : f32 from vector<1x1x1xf32>
    %55 = vector.shape_cast %50 : vector<16x1xf32> to vector<1x16x1xf32>
    %cst_14 = arith.constant dense<0.000000e+00> : vector<1xf32>
    %56 = vector.multi_reduction <add>, %55, %cst_14 [1, 2] : vector<1x16x1xf32> to vector<1xf32>
    %57 = vector.shape_cast %56 : vector<1xf32> to vector<1x1x1xf32>
    %58 = vector.extract %57[0, 0, 0] : f32 from vector<1x1x1xf32>
    %c0_15 = arith.constant 0 : index
    %c0_16 = arith.constant 0 : index
    %59 = vector.load %arg3[%c0_15, %c0_16] : memref<16x8xbf16, #tpu.memory_space<vmem>>, vector<16x8xbf16>
    %60 = arith.extf %59 : vector<16x8xbf16> to vector<16x8xf32>
    %cst_17 = arith.constant dense<0xFF800000> : vector<16xf32>
    %61 = vector.multi_reduction <maximumf>, %60, %cst_17 [1] : vector<16x8xf32> to vector<16xf32>
    %62 = vector.shape_cast %61 : vector<16xf32> to vector<16x1xf32>
    %63 = vector.broadcast %62 : vector<16x1xf32> to vector<16x8xf32>
    %64 = arith.subf %60, %63 : vector<16x8xf32>
    %65 = math.exp %64 : vector<16x8xf32>
    %cst_18 = arith.constant dense<0.000000e+00> : vector<16xf32>
    %66 = vector.multi_reduction <add>, %65, %cst_18 [1] : vector<16x8xf32> to vector<16xf32>
    %67 = vector.shape_cast %66 : vector<16xf32> to vector<16x1xf32>
    %68 = math.log %67 : vector<16x1xf32>
    %69 = arith.addf %68, %62 : vector<16x1xf32>
    %70 = tpu.iota {dimensions = array<i32: 1>} : vector<16x8xi32>
    %71 = vector.broadcast %13 : vector<16x1xi32> to vector<16x8xi32>
    %72 = arith.cmpi eq, %70, %71 : vector<16x8xi32>
    %cst_19 = arith.constant 0.000000e+00 : f32
    %73 = vector.broadcast %cst_19 : f32 to vector<16x8xf32>
    %74 = arith.select %72, %60, %73 : vector<16x8xi1>, vector<16x8xf32>
    %cst_20 = arith.constant dense<0.000000e+00> : vector<16xf32>
    %75 = vector.multi_reduction <add>, %74, %cst_20 [1] : vector<16x8xf32> to vector<16xf32>
    %76 = vector.shape_cast %75 : vector<16xf32> to vector<16x1xf32>
    %77 = arith.subf %69, %76 : vector<16x1xf32>
    %cst_21 = arith.constant 0.000000e+00 : f32
    %78 = vector.broadcast %cst_21 : f32 to vector<16x1xf32>
    %79 = arith.select %22, %77, %78 : vector<16x1xi1>, vector<16x1xf32>
    %cst_22 = arith.constant 1.000000e+00 : f32
    %cst_23 = arith.constant 0.000000e+00 : f32
    %80 = vector.broadcast %cst_22 : f32 to vector<16x1xf32>
    %81 = vector.broadcast %cst_23 : f32 to vector<16x1xf32>
    %82 = arith.select %22, %80, %81 : vector<16x1xi1>, vector<16x1xf32>
    %83 = vector.shape_cast %79 : vector<16x1xf32> to vector<1x16x1xf32>
    %cst_24 = arith.constant dense<0.000000e+00> : vector<1xf32>
    %84 = vector.multi_reduction <add>, %83, %cst_24 [1, 2] : vector<1x16x1xf32> to vector<1xf32>
    %85 = vector.shape_cast %84 : vector<1xf32> to vector<1x1x1xf32>
    %86 = vector.extract %85[0, 0, 0] : f32 from vector<1x1x1xf32>
    %87 = vector.shape_cast %82 : vector<16x1xf32> to vector<1x16x1xf32>
    %cst_25 = arith.constant dense<0.000000e+00> : vector<1xf32>
    %88 = vector.multi_reduction <add>, %87, %cst_25 [1, 2] : vector<1x16x1xf32> to vector<1xf32>
    %89 = vector.shape_cast %88 : vector<1xf32> to vector<1x1x1xf32>
    %90 = vector.extract %89[0, 0, 0] : f32 from vector<1x1x1xf32>
    %c0_26 = arith.constant 0 : index
    %c0_27 = arith.constant 0 : index
    %91 = vector.load %arg4[%c0_26, %c0_27] : memref<16x32xbf16, #tpu.memory_space<vmem>>, vector<16x32xbf16>
    %92 = arith.extf %91 : vector<16x32xbf16> to vector<16x32xf32>
    %cst_28 = arith.constant dense<0xFF800000> : vector<16xf32>
    %93 = vector.multi_reduction <maximumf>, %92, %cst_28 [1] : vector<16x32xf32> to vector<16xf32>
    %94 = vector.shape_cast %93 : vector<16xf32> to vector<16x1xf32>
    %95 = vector.broadcast %94 : vector<16x1xf32> to vector<16x32xf32>
    %96 = arith.subf %92, %95 : vector<16x32xf32>
    %97 = math.exp %96 : vector<16x32xf32>
    %cst_29 = arith.constant dense<0.000000e+00> : vector<16xf32>
    %98 = vector.multi_reduction <add>, %97, %cst_29 [1] : vector<16x32xf32> to vector<16xf32>
    %99 = vector.shape_cast %98 : vector<16xf32> to vector<16x1xf32>
    %100 = math.log %99 : vector<16x1xf32>
    %101 = arith.addf %100, %94 : vector<16x1xf32>
    %102 = tpu.iota {dimensions = array<i32: 1>} : vector<16x32xi32>
    %103 = vector.broadcast %14 : vector<16x1xi32> to vector<16x32xi32>
    %104 = arith.cmpi eq, %102, %103 : vector<16x32xi32>
    %cst_30 = arith.constant 0.000000e+00 : f32
    %105 = vector.broadcast %cst_30 : f32 to vector<16x32xf32>
    %106 = arith.select %104, %92, %105 : vector<16x32xi1>, vector<16x32xf32>
    %cst_31 = arith.constant dense<0.000000e+00> : vector<16xf32>
    %107 = vector.multi_reduction <add>, %106, %cst_31 [1] : vector<16x32xf32> to vector<16xf32>
    %108 = vector.shape_cast %107 : vector<16xf32> to vector<16x1xf32>
    %109 = arith.subf %101, %108 : vector<16x1xf32>
    %cst_32 = arith.constant 0.000000e+00 : f32
    %110 = vector.broadcast %cst_32 : f32 to vector<16x1xf32>
    %111 = arith.select %26, %109, %110 : vector<16x1xi1>, vector<16x1xf32>
    %cst_33 = arith.constant 1.000000e+00 : f32
    %cst_34 = arith.constant 0.000000e+00 : f32
    %112 = vector.broadcast %cst_33 : f32 to vector<16x1xf32>
    %113 = vector.broadcast %cst_34 : f32 to vector<16x1xf32>
    %114 = arith.select %26, %112, %113 : vector<16x1xi1>, vector<16x1xf32>
    %115 = vector.shape_cast %111 : vector<16x1xf32> to vector<1x16x1xf32>
    %cst_35 = arith.constant dense<0.000000e+00> : vector<1xf32>
    %116 = vector.multi_reduction <add>, %115, %cst_35 [1, 2] : vector<1x16x1xf32> to vector<1xf32>
    %117 = vector.shape_cast %116 : vector<1xf32> to vector<1x1x1xf32>
    %118 = vector.extract %117[0, 0, 0] : f32 from vector<1x1x1xf32>
    %119 = vector.shape_cast %114 : vector<16x1xf32> to vector<1x16x1xf32>
    %cst_36 = arith.constant dense<0.000000e+00> : vector<1xf32>
    %120 = vector.multi_reduction <add>, %119, %cst_36 [1, 2] : vector<1x16x1xf32> to vector<1xf32>
    %121 = vector.shape_cast %120 : vector<1xf32> to vector<1x1x1xf32>
    %122 = vector.extract %121[0, 0, 0] : f32 from vector<1x1x1xf32>
    %123 = tpu.iota {dimensions = array<i32: 2>} : vector<1x8x128xi32>
    %cst_37 = arith.constant 0.000000e+00 : f32
    %124 = vector.broadcast %cst_37 : f32 to vector<1x8x128xf32>
    %c0_i32_38 = arith.constant 0 : i32
    %125 = vector.broadcast %c0_i32_38 : i32 to vector<1x8x128xi32>
    %126 = arith.cmpi eq, %123, %125 : vector<1x8x128xi32>
    %127 = vector.broadcast %54 : f32 to vector<1x8x128xf32>
    %128 = arith.select %126, %127, %124 : vector<1x8x128xi1>, vector<1x8x128xf32>
    %c1_i32 = arith.constant 1 : i32
    %129 = vector.broadcast %c1_i32 : i32 to vector<1x8x128xi32>
    %130 = arith.cmpi eq, %123, %129 : vector<1x8x128xi32>
    %131 = vector.broadcast %58 : f32 to vector<1x8x128xf32>
    %132 = arith.select %130, %131, %128 : vector<1x8x128xi1>, vector<1x8x128xf32>
    %c2_i32_39 = arith.constant 2 : i32
    %133 = vector.broadcast %c2_i32_39 : i32 to vector<1x8x128xi32>
    %134 = arith.cmpi eq, %123, %133 : vector<1x8x128xi32>
    %135 = vector.broadcast %86 : f32 to vector<1x8x128xf32>
    %136 = arith.select %134, %135, %132 : vector<1x8x128xi1>, vector<1x8x128xf32>
    %c3_i32 = arith.constant 3 : i32
    %137 = vector.broadcast %c3_i32 : i32 to vector<1x8x128xi32>
    %138 = arith.cmpi eq, %123, %137 : vector<1x8x128xi32>
    %139 = vector.broadcast %90 : f32 to vector<1x8x128xf32>
    %140 = arith.select %138, %139, %136 : vector<1x8x128xi1>, vector<1x8x128xf32>
    %c4_i32 = arith.constant 4 : i32
    %141 = vector.broadcast %c4_i32 : i32 to vector<1x8x128xi32>
    %142 = arith.cmpi eq, %123, %141 : vector<1x8x128xi32>
    %143 = vector.broadcast %118 : f32 to vector<1x8x128xf32>
    %144 = arith.select %142, %143, %140 : vector<1x8x128xi1>, vector<1x8x128xf32>
    %c5_i32 = arith.constant 5 : i32
    %145 = vector.broadcast %c5_i32 : i32 to vector<1x8x128xi32>
    %146 = arith.cmpi eq, %123, %145 : vector<1x8x128xi32>
    %147 = vector.broadcast %122 : f32 to vector<1x8x128xf32>
    %148 = arith.select %146, %147, %144 : vector<1x8x128xi1>, vector<1x8x128xf32>
    %c0_40 = arith.constant 0 : index
    %c0_41 = arith.constant 0 : index
    %c0_42 = arith.constant 0 : index
    %149 = vector.load %arg6[%c0_40, %c0_41, %c0_42] : memref<1x8x128xf32, #tpu.memory_space<vmem>>, vector<1x8x128xf32>
    %150 = arith.addf %149, %148 : vector<1x8x128xf32>
    %c0_43 = arith.constant 0 : index
    %c0_44 = arith.constant 0 : index
    %c0_45 = arith.constant 0 : index
    %151 = vector.load %arg6[%c0_43, %c0_44, %c0_45] : memref<1x8x128xf32, #tpu.memory_space<vmem>>, vector<1x8x128xf32>
    tpu.vector_store %arg6[%c0_43, %c0_44, %c0_45], %150 {strides = array<i32>} : memref<1x8x128xf32, #tpu.memory_space<vmem>>, vector<1x8x128xf32>,
    return
  }
  func.func @transform_0(%arg0: i32, %arg1: i32) -> (i32, i32) {
    %c2_i32 = arith.constant 2 : i32
    %0 = arith.muli %arg0, %c2_i32 : i32
    %1 = arith.addi %0, %arg1 : i32
    %c2_i32_0 = arith.constant 2 : i32
    %2 = arith.minsi %1, %c2_i32_0 : i32
    %c0_i32 = arith.constant 0 : i32
    %c0_i32_1 = arith.constant 0 : i32
    return %2, %c0_i32 : i32, i32
  }
  func.func @transform_1(%arg0: i32, %arg1: i32) -> (i32, i32) {
    %c2_i32 = arith.constant 2 : i32
    %0 = arith.muli %arg0, %c2_i32 : i32
    %1 = arith.addi %0, %arg1 : i32
    %c2_i32_0 = arith.constant 2 : i32
    %2 = arith.minsi %1, %c2_i32_0 : i32
    %c0_i32 = arith.constant 0 : i32
    %c0_i32_1 = arith.constant 0 : i32
    return %2, %c0_i32 : i32, i32
  }
  func.func @transform_2(%arg0: i32, %arg1: i32) -> (i32, i32) {
    %c2_i32 = arith.constant 2 : i32
    %0 = arith.muli %arg0, %c2_i32 : i32
    %1 = arith.addi %0, %arg1 : i32
    %c2_i32_0 = arith.constant 2 : i32
    %2 = arith.minsi %1, %c2_i32_0 : i32
    %c0_i32 = arith.constant 0 : i32
    %c0_i32_1 = arith.constant 0 : i32
    return %2, %c0_i32 : i32, i32
  }
  func.func @transform_3(%arg0: i32, %arg1: i32) -> (i32, i32) {
    %c2_i32 = arith.constant 2 : i32
    %0 = arith.muli %arg0, %c2_i32 : i32
    %1 = arith.addi %0, %arg1 : i32
    %c2_i32_0 = arith.constant 2 : i32
    %2 = arith.minsi %1, %c2_i32_0 : i32
    %c0_i32 = arith.constant 0 : i32
    %c0_i32_1 = arith.constant 0 : i32
    return %2, %c0_i32 : i32, i32
  }
  func.func @transform_4(%arg0: i32, %arg1: i32) -> (i32, i32, i32) {
    %c0_i32 = arith.constant 0 : i32
    %c0_i32_0 = arith.constant 0 : i32
    %c0_i32_1 = arith.constant 0 : i32
    return %arg0, %c0_i32, %c0_i32_0 : i32, i32, i32
  }
}

</mosaic_0001>

<llo_original>
// kernel: tpu_custom_call.1
$region0: #{tpu_custom_call.1}
  #allocation0 [shape = 'u32[]', space=smem, size = 0x4, offset = 0x4, fixed_abs, tag = 'smem constant byte address 0x4 - core index']
  #allocation1 [shape = 'u32[144,128]{1,0:T(1,128)}', space=vmem, size = 0x12000, scoped, tag = 'internal scratch']
  %s0 = inlined_call_operand.vmem [shape: bf16[42,16], index: 0, kind: input, shape index: {}]
  %s1 = inlined_call_operand.vmem [shape: bf16[42,8], index: 1, kind: input, shape index: {}]
  %s2 = inlined_call_operand.vmem [shape: bf16[42,32], index: 2, kind: input, shape index: {}]
  %s3 = inlined_call_operand.vmem [shape: s32[42,8], index: 3, kind: input, shape index: {}]
  %s4 = inlined_call_operand.hbm [shape: f32[2,8,128], index: 4, kind: output, shape index: {}]
  %s5 = sld [smem:[#allocation0]]
  $region53: #{tpu_custom_call.1} parent=0
    _
  %s7 = ssub.s32 1, %s5
  %s8 = scalar_select 0, %s7, %s5
  $region1: #{tpu_custom_call.1} parent=0
    #allocation2 [shape = 'u8[8192]{0}', space=vmem, size = 0x2000, scoped, tag = 'output window, operand 0']
    #allocation3 [shape = 's32[2]{0}', space=sflag, size = 0x8, scoped, tag = 'scoped memory for tpu_custom_call.1']
    %9 = vsyncpa [#allocation3], 0
    %s10 = scalar_lea.sflag [#allocation3], 1
    %11 = vsyncpa %s10, 0
    loop: start=0, step=1, limit=6
    $region2: #{tpu_custom_call.1} parent=1 // loop_pre_header
      _
    $region3: #{tpu_custom_call.1} parent=1 // loop_header
      %s13 = sphi 0, %s17
      %p14 = scmp.ge.s32.totalorder %s13, 6
      %s20 = sphi 0, %s32
      %s21 = sphi 0, %s28
      %s22 = sphi 0, %s20
      %s23 = sphi 0, %s21
      %s24 = sphi 0, %s22
      %s25 = sphi 0, %s23
      %s43 = sphi 0, %s45
      %s46 = sphi 0, %s43
      %s47 = sphi 0, %s46
      %s63 = sphi 0, %s47
      %s77 = sphi 0, %s79
      %s80 = sphi 0, %s77
      %s81 = sphi 0, %s80
      %s97 = sphi 0, %s81
      %s111 = sphi 0, %s113
      %s114 = sphi 0, %s111
      %s115 = sphi 0, %s114
      %s131 = sphi 0, %s115
      %s145 = sphi 0, %s147
      %s148 = sphi 0, %s145
      %s149 = sphi 0, %s148
      %s165 = sphi 0, %s149
      %s171 = sphi 0, %s173
      %s174 = sphi 0, %s171
      %s175 = sphi 0, %s174
      %s191 = sphi 0, %s175
    $region4: #{tpu_custom_call.1} parent=1 // loop_header_branch
      %16 = sbr.rel (%p14) target = $region8
    $region5: #{tpu_custom_call.1} parent=1 // loop_body
      %s18 = ssub.s32 %s13, 1
      %s19 = ssub.s32 %s13, 2
      %s26 = sadd.s32 1, %s21
      %p27 = scmp.ge.s32.totalorder %s26, 2
      %s28 = scalar_select %p27, 0, %s26
      %s29 = sadd.s32 1, %s20
      %s30 = scalar_select %p27, %s29, %s20
      %p31 = scmp.ge.s32.totalorder %s30, 2
      %s32 = scalar_select %p31, 0, %s30
      %s33 = smul.u32 %s20, 2
      %s34 = sadd.s32 %s33, %s21
      %p35 = scmp.lt.s32.totalorder %s34, 2
      %s36 = scalar_select %p35, %s34, 2
      %s37 = smul.u32 %s32, 2
      %s38 = sadd.s32 %s37, %s28
      %p39 = scmp.lt.s32.totalorder %s38, 2
      %s40 = scalar_select %p39, %s38, 2
      %s41 = ssub.s32 %s36, %s40
      %p42 = scmp.eq.s32.totalorder %s41, 0
      %s44 = sadd.s32 %s43, 1
      %s45 = scalar_select %p42, %s43, %s44
      %p48 = pneg %p42
      %p49 = scmp.eq.s32.totalorder %s13, 3
      %p50 = por %p48, %p49
      %p51 = scmp.ne.s32.totalorder %s43, %s46
      %p52 = scmp.eq.s32.totalorder %s13, 0
      %p53 = por %p51, %p52
      %p54 = scmp.ne.s32.totalorder %s43, %s46
      %p55 = scmp.eq.s32.totalorder %s18, 3
      %p56 = por %p54, %p55
      %p57 = scmp.ne.s32.totalorder %s46, %s47
      %p58 = scmp.eq.s32.totalorder %s18, 0
      %p59 = por %p57, %p58
      %p60 = scmp.ne.s32.totalorder %s46, %s47
      %p61 = scmp.eq.s32.totalorder %s19, 3
      %p62 = por %p60, %p61
      %p64 = scmp.ne.s32.totalorder %s47, %s63
      %p65 = scmp.eq.s32.totalorder %s19, 0
      %p66 = por %p64, %p65
      %s67 = smul.u32 %s20, 2
      %s68 = sadd.s32 %s67, %s21
      %p69 = scmp.lt.s32.totalorder %s68, 2
      %s70 = scalar_select %p69, %s68, 2
      %s71 = smul.u32 %s32, 2
      %s72 = sadd.s32 %s71, %s28
      %p73 = scmp.lt.s32.totalorder %s72, 2
      %s74 = scalar_select %p73, %s72, 2
      %s75 = ssub.s32 %s70, %s74
      %p76 = scmp.eq.s32.totalorder %s75, 0
      %s78 = sadd.s32 %s77, 1
      %s79 = scalar_select %p76, %s77, %s78
      %p82 = pneg %p76
      %p83 = scmp.eq.s32.totalorder %s13, 3
      %p84 = por %p82, %p83
      %p85 = scmp.ne.s32.totalorder %s77, %s80
      %p86 = scmp.eq.s32.totalorder %s13, 0
      %p87 = por %p85, %p86
      %p88 = scmp.ne.s32.totalorder %s77, %s80
      %p89 = scmp.eq.s32.totalorder %s18, 3
      %p90 = por %p88, %p89
      %p91 = scmp.ne.s32.totalorder %s80, %s81
      %p92 = scmp.eq.s32.totalorder %s18, 0
      %p93 = por %p91, %p92
      %p94 = scmp.ne.s32.totalorder %s80, %s81
      %p95 = scmp.eq.s32.totalorder %s19, 3
      %p96 = por %p94, %p95
      %p98 = scmp.ne.s32.totalorder %s81, %s97
      %p99 = scmp.eq.s32.totalorder %s19, 0
      %p100 = por %p98, %p99
      %s101 = smul.u32 %s20, 2
      %s102 = sadd.s32 %s101, %s21
      %p103 = scmp.lt.s32.totalorder %s102, 2
      %s104 = scalar_select %p103, %s102, 2
      %s105 = smul.u32 %s32, 2
      %s106 = sadd.s32 %s105, %s28
      %p107 = scmp.lt.s32.totalorder %s106, 2
      %s108 = scalar_select %p107, %s106, 2
      %s109 = ssub.s32 %s104, %s108
      %p110 = scmp.eq.s32.totalorder %s109, 0
      %s112 = sadd.s32 %s111, 1
      %s113 = scalar_select %p110, %s111, %s112
      %p116 = pneg %p110
      %p117 = scmp.eq.s32.totalorder %s13, 3
      %p118 = por %p116, %p117
      %p119 = scmp.ne.s32.totalorder %s111, %s114
      %p120 = scmp.eq.s32.totalorder %s13, 0
      %p121 = por %p119, %p120
      %p122 = scmp.ne.s32.totalorder %s111, %s114
      %p123 = scmp.eq.s32.totalorder %s18, 3
      %p124 = por %p122, %p123
      %p125 = scmp.ne.s32.totalorder %s114, %s115
      %p126 = scmp.eq.s32.totalorder %s18, 0
      %p127 = por %p125, %p126
      %p128 = scmp.ne.s32.totalorder %s114, %s115
      %p129 = scmp.eq.s32.totalorder %s19, 3
      %p130 = por %p128, %p129
      %p132 = scmp.ne.s32.totalorder %s115, %s131
      %p133 = scmp.eq.s32.totalorder %s19, 0
      %p134 = por %p132, %p133
      %s135 = smul.u32 %s20, 2
      %s136 = sadd.s32 %s135, %s21
      %p137 = scmp.lt.s32.totalorder %s136, 2
      %s138 = scalar_select %p137, %s136, 2
      %s139 = smul.u32 %s32, 2
      %s140 = sadd.s32 %s139, %s28
      %p141 = scmp.lt.s32.totalorder %s140, 2
      %s142 = scalar_select %p141, %s140, 2
      %s143 = ssub.s32 %s138, %s142
      %p144 = scmp.eq.s32.totalorder %s143, 0
      %s146 = sadd.s32 %s145, 1
      %s147 = scalar_select %p144, %s145, %s146
      %p150 = pneg %p144
      %p151 = scmp.eq.s32.totalorder %s13, 3
      %p152 = por %p150, %p151
      %p153 = scmp.ne.s32.totalorder %s145, %s148
      %p154 = scmp.eq.s32.totalorder %s13, 0
      %p155 = por %p153, %p154
      %p156 = scmp.ne.s32.totalorder %s145, %s148
      %p157 = scmp.eq.s32.totalorder %s18, 3
      %p158 = por %p156, %p157
      %p159 = scmp.ne.s32.totalorder %s148, %s149
      %p160 = scmp.eq.s32.totalorder %s18, 0
      %p161 = por %p159, %p160
      %p162 = scmp.ne.s32.totalorder %s148, %s149
      %p163 = scmp.eq.s32.totalorder %s19, 3
      %p164 = por %p162, %p163
      %p166 = scmp.ne.s32.totalorder %s149, %s165
      %p167 = scmp.eq.s32.totalorder %s19, 0
      %p168 = por %p166, %p167
      %s169 = ssub.s32 %s20, %s32
      %p170 = scmp.eq.s32.totalorder %s169, 0
      %s172 = sadd.s32 %s171, 1
      %s173 = scalar_select %p170, %s171, %s172
      %p176 = pneg %p170
      %p177 = scmp.eq.s32.totalorder %s13, 3
      %p178 = por %p176, %p177
      %p179 = scmp.ne.s32.totalorder %s171, %s174
      %p180 = scmp.eq.s32.totalorder %s13, 0
      %p181 = por %p179, %p180
      %p182 = scmp.ne.s32.totalorder %s171, %s174
      %p183 = scmp.eq.s32.totalorder %s18, 3
      %p184 = por %p182, %p183
      %p185 = scmp.ne.s32.totalorder %s174, %s175
      %p186 = scmp.eq.s32.totalorder %s18, 0
      %p187 = por %p185, %p186
      %p188 = scmp.ne.s32.totalorder %s174, %s175
      %p189 = scmp.eq.s32.totalorder %s19, 3
      %p190 = por %p188, %p189
      %p192 = scmp.ne.s32.totalorder %s175, %s191
      %p193 = scmp.eq.s32.totalorder %s19, 0
      %p194 = por %p192, %p193
      %p195 = scmp.le.s32.totalorder 1, %s13
      %p196 = scmp.lt.s32.totalorder %s13, 5
      %p197 = pnand %p195, %p196
      %p198 = pneg %p197
      // Predicated region
      $region9: #{tpu_custom_call.1} parent=5 // pred_check
        _
      $region10: #{tpu_custom_call.1} parent=5 // pred_check_branch
        %200 = sbr.rel (%p197) target = $region12
      $region11: #{tpu_custom_call.1} parent=5 // pred_region
        %s201 = ssub.s32 %s13, 1
      $region12: #{tpu_custom_call.1} parent=5 // pred_fallthru
        _
      %p202 = scmp.lt.s32.totalorder %s13, 4
      // Predicated region
      $region13: #{tpu_custom_call.1} parent=5 // pred_check
        %p203 = pneg %p202
      $region14: #{tpu_custom_call.1} parent=5 // pred_check_branch
        %205 = sbr.rel (%p203) target = $region16
      $region15: #{tpu_custom_call.1} parent=5 // pred_region
        // Predicated region
        $region17: #{tpu_custom_call.1} parent=15 // pred_check
          %p206 = pneg %p53
        $region18: #{tpu_custom_call.1} parent=15 // pred_check_branch
          %208 = sbr.rel (%p206) target = $region20
        $region19: #{tpu_custom_call.1} parent=15 // pred_region
          %s209 = smul.u32 %s20, 2
          %s210 = sadd.s32 %s209, %s21
          %p211 = scmp.lt.s32.totalorder %s210, 2
          %s212 = scalar_select %p211, %s210, 2
          %s213 = smul.u32 2, %s212
          %p214 = scmp.lt.s32.totalorder %s213, 5
          %s215 = scalar_select %p214, %s213, 5
          %s216 = smul.addr %s215, 4
          %s217 = scalar_lea.vmem %s0, %s216
          %s218 = smul.u32 %s20, 2
          %s219 = sadd.s32 %s218, %s21
          %p220 = scmp.lt.s32.totalorder %s219, 2
          %s221 = scalar_select %p220, %s219, 2
          %s222 = smul.u32 2, %s221
        $region20: #{tpu_custom_call.1} parent=15 // pred_fallthru
          _
        // Predicated region
        $region21: #{tpu_custom_call.1} parent=15 // pred_check
          %p223 = pneg %p87
        $region22: #{tpu_custom_call.1} parent=15 // pred_check_branch
          %225 = sbr.rel (%p223) target = $region24
        $region23: #{tpu_custom_call.1} parent=15 // pred_region
          %s226 = smul.u32 %s20, 2
          %s227 = sadd.s32 %s226, %s21
          %p228 = scmp.lt.s32.totalorder %s227, 2
          %s229 = scalar_select %p228, %s227, 2
          %s230 = smul.u32 2, %s229
          %p231 = scmp.lt.s32.totalorder %s230, 5
          %s232 = scalar_select %p231, %s230, 5
          %s233 = smul.addr %s232, 4
          %s234 = scalar_lea.vmem %s1, %s233
          %s235 = smul.u32 %s20, 2
          %s236 = sadd.s32 %s235, %s21
          %p237 = scmp.lt.s32.totalorder %s236, 2
          %s238 = scalar_select %p237, %s236, 2
          %s239 = smul.u32 2, %s238
        $region24: #{tpu_custom_call.1} parent=15 // pred_fallthru
          _
        // Predicated region
        $region25: #{tpu_custom_call.1} parent=15 // pred_check
          %p240 = pneg %p121
        $region26: #{tpu_custom_call.1} parent=15 // pred_check_branch
          %242 = sbr.rel (%p240) target = $region28
        $region27: #{tpu_custom_call.1} parent=15 // pred_region
          %s243 = smul.u32 %s20, 2
          %s244 = sadd.s32 %s243, %s21
          %p245 = scmp.lt.s32.totalorder %s244, 2
          %s246 = scalar_select %p245, %s244, 2
          %s247 = smul.u32 2, %s246
          %p248 = scmp.lt.s32.totalorder %s247, 5
          %s249 = scalar_select %p248, %s247, 5
          %s250 = smul.addr %s249, 4
          %s251 = scalar_lea.vmem %s2, %s250
          %s252 = smul.u32 %s20, 2
          %s253 = sadd.s32 %s252, %s21
          %p254 = scmp.lt.s32.totalorder %s253, 2
          %s255 = scalar_select %p254, %s253, 2
          %s256 = smul.u32 2, %s255
        $region28: #{tpu_custom_call.1} parent=15 // pred_fallthru
          _
        // Predicated region
        $region29: #{tpu_custom_call.1} parent=15 // pred_check
          %p257 = pneg %p155
        $region30: #{tpu_custom_call.1} parent=15 // pred_check_branch
          %259 = sbr.rel (%p257) target = $region32
        $region31: #{tpu_custom_call.1} parent=15 // pred_region
          %s260 = smul.u32 %s20, 2
          %s261 = sadd.s32 %s260, %s21
          %p262 = scmp.lt.s32.totalorder %s261, 2
          %s263 = scalar_select %p262, %s261, 2
          %s264 = smul.u32 2, %s263
          %p265 = scmp.lt.s32.totalorder %s264, 5
          %s266 = scalar_select %p265, %s264, 5
          %s267 = smul.addr %s266, 8
          %s268 = scalar_lea.vmem %s3, %s267
          %s269 = smul.u32 %s20, 2
          %s270 = sadd.s32 %s269, %s21
          %p271 = scmp.lt.s32.totalorder %s270, 2
          %s272 = scalar_select %p271, %s270, 2
          %s273 = smul.u32 2, %s272
        $region32: #{tpu_custom_call.1} parent=15 // pred_fallthru
          _
      $region16: #{tpu_custom_call.1} parent=5 // pred_fallthru
        _
      %p274 = scmp.le.s32.totalorder 1, %s13
      %p275 = scmp.lt.s32.totalorder %s13, 5
      %p276 = pnand %p274, %p275
      %p277 = pneg %p276
      // Predicated region
      $region33: #{tpu_custom_call.1} parent=5 // pred_check
        _
      $region34: #{tpu_custom_call.1} parent=5 // pred_check_branch
        %279 = sbr.rel (%p276) target = $region36
      $region35: #{tpu_custom_call.1} parent=5 // pred_region
        %s280 = ssub.s32 %s13, 1
        %s281 = smul.u32 %s22, 2
        %s282 = sadd.s32 %s281, %s23
        %p283 = scmp.lt.s32.totalorder %s282, 2
        %s284 = scalar_select %p283, %s282, 2
        %s285 = smul.u32 2, %s284
        %p286 = scmp.lt.s32.totalorder %s285, 5
        %s287 = scalar_select %p286, %s285, 5
        %s288 = smul.addr %s287, 4
        %s289 = scalar_lea.vmem %s0, %s288
        %p290 = pneg %p59
        %p291 = pneg %p56
        %s292 = smul.u32 %s22, 2
        %s293 = sadd.s32 %s292, %s23
        %p294 = scmp.lt.s32.totalorder %s293, 2
        %s295 = scalar_select %p294, %s293, 2
        %s296 = smul.u32 2, %s295
        %p297 = scmp.lt.s32.totalorder %s296, 5
        %s298 = scalar_select %p297, %s296, 5
        %s299 = smul.addr %s298, 4
        %s300 = scalar_lea.vmem %s1, %s299
        %p301 = pneg %p93
        %p302 = pneg %p90
        %s303 = smul.u32 %s22, 2
        %s304 = sadd.s32 %s303, %s23
        %p305 = scmp.lt.s32.totalorder %s304, 2
        %s306 = scalar_select %p305, %s304, 2
        %s307 = smul.u32 2, %s306
        %p308 = scmp.lt.s32.totalorder %s307, 5
        %s309 = scalar_select %p308, %s307, 5
        %s310 = smul.addr %s309, 4
        %s311 = scalar_lea.vmem %s2, %s310
        %p312 = pneg %p127
        %p313 = pneg %p124
        %s314 = smul.u32 %s22, 2
        %s315 = sadd.s32 %s314, %s23
        %p316 = scmp.lt.s32.totalorder %s315, 2
        %s317 = scalar_select %p316, %s315, 2
        %s318 = smul.u32 2, %s317
        %p319 = scmp.lt.s32.totalorder %s318, 5
        %s320 = scalar_select %p319, %s318, 5
        %s321 = smul.addr %s320, 8
        %s322 = scalar_lea.vmem %s3, %s321
        %p323 = pneg %p161
        %p324 = pneg %p158
        %p325 = pneg %p187
        %p326 = pneg %p184
        %s327 = sand.u32 %s174, 1
        %s328 = scalar_lea.sflag [#allocation3], %s327
        %s329 = sand.u32 %s174, 1
        %s330 = smul.addr %s329, 8
        %s331 = scalar_lea.vmem [#allocation2], %s330
        %s332 = smul.u32 %s22, 2
        %s333 = sadd.s32 %s332, %s23
        %p334 = scmp.lt.s32.totalorder %s333, 2
        %s335 = scalar_select %p334, %s333, 2
        %s336 = smul.u32 2, %s335
        %p337 = scmp.lt.s32.totalorder %s336, 5
        %s338 = scalar_select %p337, %s336, 5
        %s339 = smul.addr %s338, 4
        %s340 = scalar_lea.vmem %s0, %s339
        %s341 = smul.u32 %s22, 2
        %s342 = sadd.s32 %s341, %s23
        %p343 = scmp.lt.s32.totalorder %s342, 2
        %s344 = scalar_select %p343, %s342, 2
        %s345 = smul.u32 2, %s344
        %s346 = smul.u32 %s22, 2
        %s347 = sadd.s32 %s346, %s23
        %p348 = scmp.lt.s32.totalorder %s347, 2
        %s349 = scalar_select %p348, %s347, 2
        %s350 = smul.u32 2, %s349
        %p351 = scmp.lt.s32.totalorder %s350, 5
        %s352 = scalar_select %p351, %s350, 5
        %s353 = smul.addr %s352, 4
        %s354 = scalar_lea.vmem %s1, %s353
        %s355 = smul.u32 %s22, 2
        %s356 = sadd.s32 %s355, %s23
        %p357 = scmp.lt.s32.totalorder %s356, 2
        %s358 = scalar_select %p357, %s356, 2
        %s359 = smul.u32 2, %s358
        %s360 = smul.u32 %s22, 2
        %s361 = sadd.s32 %s360, %s23
        %p362 = scmp.lt.s32.totalorder %s361, 2
        %s363 = scalar_select %p362, %s361, 2
        %s364 = smul.u32 2, %s363
        %p365 = scmp.lt.s32.totalorder %s364, 5
        %s366 = scalar_select %p365, %s364, 5
        %s367 = smul.addr %s366, 4
        %s368 = scalar_lea.vmem %s2, %s367
        %s369 = smul.u32 %s22, 2
        %s370 = sadd.s32 %s369, %s23
        %p371 = scmp.lt.s32.totalorder %s370, 2
        %s372 = scalar_select %p371, %s370, 2
        %s373 = smul.u32 2, %s372
        %s374 = smul.u32 %s22, 2
        %s375 = sadd.s32 %s374, %s23
        %p376 = scmp.lt.s32.totalorder %s375, 2
        %s377 = scalar_select %p376, %s375, 2
        %s378 = smul.u32 2, %s377
        %p379 = scmp.lt.s32.totalorder %s378, 5
        %s380 = scalar_select %p379, %s378, 5
        %s381 = smul.addr %s380, 8
        %s382 = scalar_lea.vmem %s3, %s381
        %s383 = smul.u32 %s22, 2
        %s384 = sadd.s32 %s383, %s23
        %p385 = scmp.lt.s32.totalorder %s384, 2
        %s386 = scalar_select %p385, %s384, 2
        %s387 = smul.u32 2, %s386
        %p388 = scmp.eq.s32.totalorder %s23, 0
        // Predicated region
        $region37: #{tpu_custom_call.1} parent=35 // pred_check
          %p389 = pneg %p388
        $region38: #{tpu_custom_call.1} parent=35 // pred_check_branch
          %391 = sbr.rel (%p389) target = $region40
        $region39: #{tpu_custom_call.1} parent=35 // pred_region
          %392 = vst [vmem:[%s331] sm:$0xff] 0.0
        $region40: #{tpu_custom_call.1} parent=35 // pred_fallthru
          _
        %s393 = smul.u32 %s22, 2
        %s394 = sadd.s32 %s393, %s23
        %s395 = smul.u32 %s394, 16
        %v396 = vlaneseq
        %v397 = vshrl.u32 %v396, 7
        %v398 = vadd.s32 %v397, 8
        %v399 = vstv %s395
        %v400 = vadd.s32 %v399, %v397
        %v401 = vadd.s32 %v399, %v398
        %vm402 = vcmp.lt.s32.totalorder %v400, 42
        %vm403 = vcmp.lt.s32.totalorder %v401, 42
        %v404 = vld [vmem:[%s382] sm:$0xff]
        %v405 = vld [vmem:[%s382 + $0x8] sm:$0xff]
        %vm406 = vcmp.ne.s32.totalorder %v404, 0
        %vm407 = vcmp.ne.s32.totalorder %v405, 0
        %vm408 = vmand %vm406, %vm402
        %vm409 = vmand %vm407, %vm403
        %v410 = vld [vmem:[%s340] sm:$0xf]
        %v411 = vld [vmem:[%s340 + $0x4] sm:$0xf]
        %v412 = vunpack.c.l.bf16 %v410
        %v413 = vunpack.c.l.bf16 %v411
        %vm414 = vcmask 130048
        %v415 = vsel %vm414, %v412, -inf
        %416 = vmax.xlane.f32.xlu0 %v415
        %v417 = vpop.xlane.xlu0 %416
        %v418 = vsel %vm414, %v413, -inf
        %419 = vmax.xlane.f32.xlu0 %v418
        %v420 = vpop.xlane.xlu0 %419
        %v421 = vsub.f32 %v412, %v417
        %v422 = vsub.f32 %v413, %v420
        %v423 = vmul.f32 %v421, 1.442695
        %v424 = vpow.pop %v423
        %v425 = vmul.f32 %v422, 1.442695
        %v426 = vpow.pop %v425
        %v427 = vsel %vm414, %v424, 0.0
        %428 = vadd.xlane.f32.xlu0 %v427
        %v429 = vpop.xlane.xlu0 %428
        %v430 = vsel %vm414, %v426, 0.0
        %431 = vadd.xlane.f32.xlu0 %v430
        %v432 = vpop.xlane.xlu0 %431
        %v433 = vlog2.pop %v429
        %v434 = vmul.f32 %v433, 0.6931472
        %v435 = vlog2.pop %v432
        %v436 = vmul.f32 %v435, 0.6931472
        %v437 = vadd.f32 %v434, %v417
        %v438 = vadd.f32 %v436, %v420
        %v439 = vlaneseq
        %v440 = vand.u32 %v439, 127
        %441 = vset.pattern.permute.xlu0 0
        %442 = vperm.xlu0 %441, %v404
        %v443 = vpop.permute.xlu0 %442
        %444 = vset.pattern.permute.xlu0 0
        %445 = vperm.xlu0 %444, %v405
        %v446 = vpop.permute.xlu0 %445
        %vm447 = vcmp.eq.s32.totalorder %v440, %v443
        %vm448 = vcmp.eq.s32.totalorder %v440, %v446
        %v449 = vsel %vm447, %v412, 0.0
        %v450 = vsel %vm448, %v413, 0.0
        %v451 = vsel %vm414, %v449, 0.0
        %452 = vadd.xlane.f32.xlu0 %v451
        %v453 = vpop.xlane.xlu0 %452
        %v454 = vsel %vm414, %v450, 0.0
        %455 = vadd.xlane.f32.xlu0 %v454
        %v456 = vpop.xlane.xlu0 %455
        %v457 = vsub.f32 %v437, %v453
        %v458 = vsub.f32 %v438, %v456
        %v459 = vsel %vm408, %v457, 0.0
        %v460 = vsel %vm409, %v458, 0.0
        %v461 = vsel %vm408, 1.0, 0.0
        %v462 = vsel %vm409, 1.0, 0.0
        %465 = vrot.lane.b32.xlu0 %v459, 125
        %v466 = vpop.permute.xlu0 %465
        %467 = vrot.lane.b32.xlu0 %v460, 125
        %v468 = vpop.permute.xlu0 %467
        %vm471 = vcmask 7168
        %v472 = vsel %vm471, %v466, 0.0
        %v473 = vsel %vm471, %v468, 0.0
        %v474 = vadd.f32 %v472, %v473
        %475 = vadd.xlane.f32.xlu0 %v474
        %v476 = vpop.xlane.xlu0 %475
        %v477 = vrot.slane %v476, 4
        %v478 = vadd.f32 %v476, %v477
        %v479 = vrot.slane %v478, 2
        %v480 = vadd.f32 %v478, %v479
        %v481 = vrot.slane %v480, 1
        %v482 = vadd.f32 %v480, %v481
        %s483 = vtos %v482
        %486 = vrot.lane.b32.xlu0 %v461, 125
        %v487 = vpop.permute.xlu0 %486
        %488 = vrot.lane.b32.xlu0 %v462, 125
        %v489 = vpop.permute.xlu0 %488
        %v492 = vsel %vm471, %v487, 0.0
        %v493 = vsel %vm471, %v489, 0.0
        %v494 = vadd.f32 %v492, %v493
        %495 = vadd.xlane.f32.xlu0 %v494
        %v496 = vpop.xlane.xlu0 %495
        %v497 = vrot.slane %v496, 4
        %v498 = vadd.f32 %v496, %v497
        %v499 = vrot.slane %v498, 2
        %v500 = vadd.f32 %v498, %v499
        %v501 = vrot.slane %v500, 1
        %v502 = vadd.f32 %v500, %v501
        %s503 = vtos %v502
        %v504 = vld [vmem:[%s354] sm:$0xf]
        %v505 = vld [vmem:[%s354 + $0x4] sm:$0xf]
        %v506 = vunpack.c.l.bf16 %v504
        %v507 = vunpack.c.l.bf16 %v505
        %vm508 = vcmask 64512
        %v509 = vsel %vm508, %v506, -inf
        %510 = vmax.xlane.f32.xlu0 %v509
        %v511 = vpop.xlane.xlu0 %510
        %v512 = vsel %vm508, %v507, -inf
        %513 = vmax.xlane.f32.xlu0 %v512
        %v514 = vpop.xlane.xlu0 %513
        %v515 = vsub.f32 %v506, %v511
        %v516 = vsub.f32 %v507, %v514
        %v517 = vmul.f32 %v515, 1.442695
        %v518 = vpow.pop %v517
        %v519 = vmul.f32 %v516, 1.442695
        %v520 = vpow.pop %v519
        %v521 = vsel %vm508, %v518, 0.0
        %522 = vadd.xlane.f32.xlu0 %v521
        %v523 = vpop.xlane.xlu0 %522
        %v524 = vsel %vm508, %v520, 0.0
        %525 = vadd.xlane.f32.xlu0 %v524
        %v526 = vpop.xlane.xlu0 %525
        %v527 = vlog2.pop %v523
        %v528 = vmul.f32 %v527, 0.6931472
        %v529 = vlog2.pop %v526
        %v530 = vmul.f32 %v529, 0.6931472
        %v531 = vadd.f32 %v528, %v511
        %v532 = vadd.f32 %v530, %v514
        %533 = vset.pattern.permute.xlu0 1
        %534 = vperm.xlu0 %533, %v404
        %v535 = vpop.permute.xlu0 %534
        %536 = vset.pattern.permute.xlu0 1
        %537 = vperm.xlu0 %536, %v405
        %v538 = vpop.permute.xlu0 %537
        %vm539 = vcmp.eq.s32.totalorder %v440, %v535
        %vm540 = vcmp.eq.s32.totalorder %v440, %v538
        %v541 = vsel %vm539, %v506, 0.0
        %v542 = vsel %vm540, %v507, 0.0
        %v543 = vsel %vm508, %v541, 0.0
        %544 = vadd.xlane.f32.xlu0 %v543
        %v545 = vpop.xlane.xlu0 %544
        %v546 = vsel %vm508, %v542, 0.0
        %547 = vadd.xlane.f32.xlu0 %v546
        %v548 = vpop.xlane.xlu0 %547
        %v549 = vsub.f32 %v531, %v545
        %v550 = vsub.f32 %v532, %v548
        %v551 = vsel %vm408, %v549, 0.0
        %v552 = vsel %vm409, %v550, 0.0
        %555 = vrot.lane.b32.xlu0 %v551, 124
        %v556 = vpop.permute.xlu0 %555
        %557 = vrot.lane.b32.xlu0 %v552, 124
        %v558 = vpop.permute.xlu0 %557
        %v561 = vsel %vm471, %v556, 0.0
        %v562 = vsel %vm471, %v558, 0.0
        %v563 = vadd.f32 %v561, %v562
        %564 = vadd.xlane.f32.xlu0 %v563
        %v565 = vpop.xlane.xlu0 %564
        %v566 = vrot.slane %v565, 4
        %v567 = vadd.f32 %v565, %v566
        %v568 = vrot.slane %v567, 2
        %v569 = vadd.f32 %v567, %v568
        %v570 = vrot.slane %v569, 1
        %v571 = vadd.f32 %v569, %v570
        %s572 = vtos %v571
        %573 = vrot.lane.b32.xlu0 %v461, 124
        %v574 = vpop.permute.xlu0 %573
        %575 = vrot.lane.b32.xlu0 %v462, 124
        %v576 = vpop.permute.xlu0 %575
        %v579 = vsel %vm471, %v574, 0.0
        %v580 = vsel %vm471, %v576, 0.0
        %v581 = vadd.f32 %v579, %v580
        %582 = vadd.xlane.f32.xlu0 %v581
        %v583 = vpop.xlane.xlu0 %582
        %v584 = vrot.slane %v583, 4
        %v585 = vadd.f32 %v583, %v584
        %v586 = vrot.slane %v585, 2
        %v587 = vadd.f32 %v585, %v586
        %v588 = vrot.slane %v587, 1
        %v589 = vadd.f32 %v587, %v588
        %s590 = vtos %v589
        %v591 = vld [vmem:[%s368] sm:$0xf]
        %v592 = vld [vmem:[%s368 + $0x4] sm:$0xf]
        %v593 = vunpack.c.l.bf16 %v591
        %v594 = vunpack.c.l.bf16 %v592
        %vm595 = vcmask 261120
        %v596 = vsel %vm595, %v593, -inf
        %597 = vmax.xlane.f32.xlu0 %v596
        %v598 = vpop.xlane.xlu0 %597
        %v599 = vsel %vm595, %v594, -inf
        %600 = vmax.xlane.f32.xlu0 %v599
        %v601 = vpop.xlane.xlu0 %600
        %v602 = vsub.f32 %v593, %v598
        %v603 = vsub.f32 %v594, %v601
        %v604 = vmul.f32 %v602, 1.442695
        %v605 = vpow.pop %v604
        %v606 = vmul.f32 %v603, 1.442695
        %v607 = vpow.pop %v606
        %v608 = vsel %vm595, %v605, 0.0
        %609 = vadd.xlane.f32.xlu0 %v608
        %v610 = vpop.xlane.xlu0 %609
        %v611 = vsel %vm595, %v607, 0.0
        %612 = vadd.xlane.f32.xlu0 %v611
        %v613 = vpop.xlane.xlu0 %612
        %v614 = vlog2.pop %v610
        %v615 = vmul.f32 %v614, 0.6931472
        %v616 = vlog2.pop %v613
        %v617 = vmul.f32 %v616, 0.6931472
        %v618 = vadd.f32 %v615, %v598
        %v619 = vadd.f32 %v617, %v601
        %620 = vset.pattern.permute.xlu0 2
        %621 = vperm.xlu0 %620, %v404
        %v622 = vpop.permute.xlu0 %621
        %623 = vset.pattern.permute.xlu0 2
        %624 = vperm.xlu0 %623, %v405
        %v625 = vpop.permute.xlu0 %624
        %vm626 = vcmp.eq.s32.totalorder %v440, %v622
        %vm627 = vcmp.eq.s32.totalorder %v440, %v625
        %v628 = vsel %vm626, %v593, 0.0
        %v629 = vsel %vm627, %v594, 0.0
        %v630 = vsel %vm595, %v628, 0.0
        %631 = vadd.xlane.f32.xlu0 %v630
        %v632 = vpop.xlane.xlu0 %631
        %v633 = vsel %vm595, %v629, 0.0
        %634 = vadd.xlane.f32.xlu0 %v633
        %v635 = vpop.xlane.xlu0 %634
        %v636 = vsub.f32 %v618, %v632
        %v637 = vsub.f32 %v619, %v635
        %v638 = vsel %vm408, %v636, 0.0
        %v639 = vsel %vm409, %v637, 0.0
        %642 = vrot.lane.b32.xlu0 %v638, 123
        %v643 = vpop.permute.xlu0 %642
        %644 = vrot.lane.b32.xlu0 %v639, 123
        %v645 = vpop.permute.xlu0 %644
        %v648 = vsel %vm471, %v643, 0.0
        %v649 = vsel %vm471, %v645, 0.0
        %v650 = vadd.f32 %v648, %v649
        %651 = vadd.xlane.f32.xlu0 %v650
        %v652 = vpop.xlane.xlu0 %651
        %v653 = vrot.slane %v652, 4
        %v654 = vadd.f32 %v652, %v653
        %v655 = vrot.slane %v654, 2
        %v656 = vadd.f32 %v654, %v655
        %v657 = vrot.slane %v656, 1
        %v658 = vadd.f32 %v656, %v657
        %s659 = vtos %v658
        %660 = vrot.lane.b32.xlu0 %v461, 123
        %v661 = vpop.permute.xlu0 %660
        %662 = vrot.lane.b32.xlu0 %v462, 123
        %v663 = vpop.permute.xlu0 %662
        %v666 = vsel %vm471, %v661, 0.0
        %v667 = vsel %vm471, %v663, 0.0
        %v668 = vadd.f32 %v666, %v667
        %669 = vadd.xlane.f32.xlu0 %v668
        %v670 = vpop.xlane.xlu0 %669
        %v671 = vrot.slane %v670, 4
        %v672 = vadd.f32 %v670, %v671
        %v673 = vrot.slane %v672, 2
        %v674 = vadd.f32 %v672, %v673
        %v675 = vrot.slane %v674, 1
        %v676 = vadd.f32 %v674, %v675
        %s677 = vtos %v676
        %vm678 = vcmp.eq.s32.totalorder %v440, 0
        %v679 = vstv %s483
        %v680 = vsel %vm678, %v679, 0.0
        %vm681 = vcmp.eq.s32.totalorder %v440, 1
        %v682 = vstv %s503
        %v683 = vsel %vm681, %v682, %v680
        %vm684 = vcmp.eq.s32.totalorder %v440, 2
        %v685 = vstv %s572
        %v686 = vsel %vm684, %v685, %v683
        %vm687 = vcmp.eq.s32.totalorder %v440, 3
        %v688 = vstv %s590
        %v689 = vsel %vm687, %v688, %v686
        %vm690 = vcmp.eq.s32.totalorder %v440, 4
        %v691 = vstv %s659
        %v692 = vsel %vm690, %v691, %v689
        %vm693 = vcmp.eq.s32.totalorder %v440, 5
        %v694 = vstv %s677
        %v695 = vsel %vm693, %v694, %v692
        %v696 = vld [vmem:[%s331] sm:$0xff]
        %v697 = vadd.f32 %v696, %v695
        %698 = vst [vmem:[%s331] sm:$0xff] %v697
        %s699 = sand.u32 %s174, 1
        %s700 = scalar_lea.sflag [#allocation3], %s699
        %s701 = sand.u32 %s174, 1
        %s702 = smul.addr %s701, 8
        %s703 = scalar_lea.vmem [#allocation2], %s702
        // Predicated region
        $region41: #{tpu_custom_call.1} parent=35 // pred_check
          %p704 = pneg %p184
        $region42: #{tpu_custom_call.1} parent=35 // pred_check_branch
          %706 = sbr.rel (%p704) target = $region44
        $region43: #{tpu_custom_call.1} parent=35 // pred_region
          %s708 = ssub.s32 128, 128
          %709 = vsyncadd %s700, %s708
          %s710 = smul.addr %s22, 128
          %s711 = scalar_lea.hbm %s4, %s710
          %s713 = sshll.u32 %s703, 4
          %s714 = int_to_ptr.vmem [resolvable:$true] %s713
          %716 = dma.vmem_to_hbm [thread:$0]  %s714, 128, %s711, %s700
        $region44: #{tpu_custom_call.1} parent=35 // pred_fallthru
          _
      $region36: #{tpu_custom_call.1} parent=5 // pred_fallthru
        _
      %p717 = scmp.le.s32.totalorder 2, %s13
      // Predicated region
      $region45: #{tpu_custom_call.1} parent=5 // pred_check
        %p718 = pneg %p717
      $region46: #{tpu_custom_call.1} parent=5 // pred_check_branch
        %720 = sbr.rel (%p718) target = $region48
      $region47: #{tpu_custom_call.1} parent=5 // pred_region
        %s721 = ssub.s32 %s13, 2
        // Predicated region
        $region49: #{tpu_custom_call.1} parent=47 // pred_check
          %p722 = pneg %p190
        $region50: #{tpu_custom_call.1} parent=47 // pred_check_branch
          %724 = sbr.rel (%p722) target = $region52
        $region51: #{tpu_custom_call.1} parent=47 // pred_region
          %s725 = sand.u32 %s175, 1
          %s726 = scalar_lea.sflag [#allocation3], %s725
          %s727 = sand.u32 %s175, 1
          %s728 = smul.addr %s727, 8
          %s729 = scalar_lea.vmem [#allocation2], %s728
          %730 = dma.done %s726, 128
        $region52: #{tpu_custom_call.1} parent=47 // pred_fallthru
          _
      $region48: #{tpu_custom_call.1} parent=5 // pred_fallthru
        _
    $region6: #{tpu_custom_call.1} parent=1 // loop_footer
      %s17 = sadd.s32 1, %s13
    $region7: #{tpu_custom_call.1} parent=1 // loop_footer_branch
      %12 = sbr.rel target = $region3
    $region8: #{tpu_custom_call.1} parent=1 // loop_exit
      _
    %731 = vsyncpa [#allocation3], 1
    %s732 = scalar_lea.sflag [#allocation3], 1
    %733 = vsyncpa %s732, 1

</llo_original>
